<compile_context>
chip_gen: v7x
topology: tpu7x:2x2x1
jax: 0.10.0
libtpu: 0.0.40
codegen_flags: <defaults>
</compile_context>

<pallas_src>
import functools

import numpy as np
import jax
import jax.numpy as jnp
from jax.experimental import pallas as pl
from jax.experimental.pallas import tpu as pltpu


def pose_kernel(x_ref, wc_ref, wf_ref, bf_ref, wr_ref, br_ref, o_ref, acc_ref,
                *, inv_p):
    # x_ref:  (1, C, tile_p)  bf16   image tile, spatial on lanes
    # wc_ref: (F, C)          bf16   1x1-conv (CNN stand-in) weight
    # wf_ref: (H0, F)         f32    fc0 weight (PyTorch (out, in) layout)
    # bf_ref: (H0, 1)         f32    fc0 bias (column)
    # wr_ref: (D, H0)         f32    reg weight
    # br_ref: (D, 1)          f32    reg bias (column)
    # o_ref:  (1, D, 1)       f32    pose output (column per batch element)
    # acc_ref:(F, 1)          f32    global-average-pool partial-sum scratch
    p = pl.program_id(1)

    @pl.when(p == 0)
    def _():
        acc_ref[...] = jnp.zeros_like(acc_ref)

    # --- CNN stand-in on this spatial tile: 1x1 conv + ReLU, then partial
    # --- global-average-pool sum over the lane (spatial) axis.
    x = x_ref[0]                                            # (C, tile_p) bf16
    feat = jnp.dot(wc_ref[...], x,
                   preferred_element_type=jnp.float32)      # (F, tile_p) f32
    feat = jnp.maximum(feat, 0.0)
    acc_ref[...] += jnp.sum(feat, axis=1, keepdims=True)    # (F, 1)

    # --- epilogue only once per batch element, on the last spatial tile ---
    @pl.when(p == pl.num_programs(1) - 1)
    def _():
        cnn_feat = acc_ref[...] * inv_p                     # (F, 1) mean pool
        # fc0 -> ReLU -> Dropout (identity in eval)
        h = jnp.dot(wf_ref[...], cnn_feat,
                    preferred_element_type=jnp.float32) + bf_ref[...]
        h = jnp.maximum(h, 0.0)                             # (H0, 1)
        # reg head + output_norm == 1: tanh * pi
        pose = jnp.dot(wr_ref[...], h,
                       preferred_element_type=jnp.float32) + br_ref[...]
        o_ref[0] = jnp.tanh(pose) * jnp.float32(np.pi)      # (D, 1)


def _pick_tile_p(P):
    for t in (512, 256, 128):
        if P % t == 0:
            return t
    return P  # block equal to the full dim is always legal


def pose_forward(img, w_cnn, w_fc, b_fc, w_reg, b_reg, *, tile_p=None):
    """img: (B, C, H, W) f32.  Weights in PyTorch (out, in) layout."""
    B, C, H, W = img.shape
    P = H * W
    F = w_cnn.shape[0]
    H0 = w_fc.shape[0]
    D = w_reg.shape[0]
    if tile_p is None:
        tile_p = _pick_tile_p(P)
    assert P % tile_p == 0
    n_p = P // tile_p

    # Layout glue: pure reshape (no transpose) keeps P lane-dense; bf16 cast
    # halves HBM traffic for the only large operand.
    x = img.reshape(B, C, P).astype(jnp.bfloat16)
    wc = w_cnn.astype(jnp.bfloat16)
    wf = w_fc.astype(jnp.float32)
    wr = w_reg.astype(jnp.float32)
    bf = b_fc.reshape(H0, 1).astype(jnp.float32)
    br = b_reg.reshape(D, 1).astype(jnp.float32)

    kernel = functools.partial(pose_kernel, inv_p=float(1.0 / P))

    out = pl.pallas_call(
        kernel,
        out_shape=jax.ShapeDtypeStruct((B, D, 1), jnp.float32),
        grid=(B, n_p),  # reduction (spatial) axis last
        in_specs=[
            pl.BlockSpec((1, C, tile_p), lambda b, p: (b, 0, p)),
            pl.BlockSpec((F, C), lambda b, p: (0, 0)),
            pl.BlockSpec((H0, F), lambda b, p: (0, 0)),
            pl.BlockSpec((H0, 1), lambda b, p: (0, 0)),
            pl.BlockSpec((D, H0), lambda b, p: (0, 0)),
            pl.BlockSpec((D, 1), lambda b, p: (0, 0)),
        ],
        out_specs=pl.BlockSpec((1, D, 1), lambda b, p: (b, 0, 0)),
        scratch_shapes=[pltpu.VMEM((F, 1), jnp.float32)],
        compiler_params=pltpu.CompilerParams(
            dimension_semantics=("parallel", "arbitrary")),
    )(x, wc, wf, bf, wr, br)
    return out.reshape(B, D)


def reference_forward(img, w_cnn, w_fc, b_fc, w_reg, b_reg):
    """Pure-JAX reference with the same bf16 quantization of x / w_cnn."""
    B, C, H, W = img.shape
    x = img.reshape(B, C, H * W).astype(jnp.bfloat16).astype(jnp.float32)
    wc = w_cnn.astype(jnp.bfloat16).astype(jnp.float32)
    feat = jnp.maximum(jnp.einsum('fc,bcp->bfp', wc, x), 0.0)
    cnn_feat = jnp.mean(feat, axis=2)                       # (B, F)
    h = jnp.maximum(cnn_feat @ w_fc.T + b_fc, 0.0)          # (B, H0)
    pose = h @ w_reg.T + b_reg                              # (B, D)
    return jnp.tanh(pose) * np.pi


if __name__ == "__main__":
    # Small shapes consistent with the module's forward contract:
    #   img: (bsz, 3, H, W) -> pose: (bsz, pose_dim)
    B, C, H, W = 2, 3, 16, 32
    FEAT_SIZE = 32        # stand-in for self.feat_size (512/2048 in real model)
    FC_SIZE = 32          # opts.num_fc = 1, opts.fc_sizes = [32]
    POSE_DIM = 8          # opts.pose_dim
    P = H * W

    key = jax.random.PRNGKey(0)
    k_img, k_wc, k_wf, k_wr = jax.random.split(key, 4)

    # NCHW image input (as PyTorch would receive it)
    img = jax.random.normal(k_img, (B, C, H, W), dtype=jnp.float32)

    # Deterministic parameter init mirroring _init_weight(mode='normal'):
    # weights ~ N(0, 0.01), biases = 0.  PyTorch-native (out, in) layout.
    w_cnn = 0.01 * jax.random.normal(k_wc, (FEAT_SIZE, C), dtype=jnp.float32)
    w_fc = 0.01 * jax.random.normal(k_wf, (FC_SIZE, FEAT_SIZE), dtype=jnp.float32)
    b_fc = jnp.zeros((FC_SIZE,), dtype=jnp.float32)
    w_reg = 0.01 * jax.random.normal(k_wr, (POSE_DIM, FC_SIZE), dtype=jnp.float32)
    b_reg = jnp.zeros((POSE_DIM,), dtype=jnp.float32)

    # tile_p=128 so the test exercises the multi-tile pooled reduction
    # (grid = (2, 4)); real image sizes use the default 512-wide tiles.
    pose = pose_forward(img, w_cnn, w_fc, b_fc, w_reg, b_reg, tile_p=128)
    pose = jax.block_until_ready(pose)

    ref = reference_forward(img, w_cnn, w_fc, b_fc, w_reg, b_reg)
    np.testing.assert_allclose(np.asarray(pose), np.asarray(ref),
                               rtol=1e-4, atol=1e-5)
    assert pose.shape == (B, POSE_DIM)
    print("KERNEL_OK")
</pallas_src>

<mosaic_0001>
module attributes {stable_mosaic.version = 11 : i64} {
  func.func @pose_kernel(%arg0: i32, %arg1: i32, %arg2: memref<1x3x128xbf16, #tpu.memory_space<vmem>>, %arg3: memref<32x3xbf16, #tpu.memory_space<vmem>>, %arg4: memref<32x32xf32, #tpu.memory_space<vmem>>, %arg5: memref<32x1xf32, #tpu.memory_space<vmem>>, %arg6: memref<8x32xf32, #tpu.memory_space<vmem>>, %arg7: memref<8x1xf32, #tpu.memory_space<vmem>>, %arg8: memref<1x8x1xf32, #tpu.memory_space<vmem>>, %arg9: memref<32x1xf32, #tpu.memory_space<vmem>>) attributes {dimension_semantics = [#tpu.dimension_semantics<parallel>, #tpu.dimension_semantics<arbitrary>], iteration_bounds = array<i64: 2, 4>, scalar_prefetch = 0 : i64, scratch_operands = 1 : i64, tpu.core_type = #tpu.core_type<tc>, window_params = [{transform_indices = @transform_0, window_bounds = array<i64: 1, 3, 128>}, {pipeline_mode = #tpu.pipeline_mode<synchronous>, transform_indices = @transform_1, window_bounds = array<i64: 32, 3>}, {pipeline_mode = #tpu.pipeline_mode<synchronous>, transform_indices = @transform_2, window_bounds = array<i64: 32, 32>}, {pipeline_mode = #tpu.pipeline_mode<synchronous>, transform_indices = @transform_3, window_bounds = array<i64: 32, 1>}, {pipeline_mode = #tpu.pipeline_mode<synchronous>, transform_indices = @transform_4, window_bounds = array<i64: 8, 32>}, {pipeline_mode = #tpu.pipeline_mode<synchronous>, transform_indices = @transform_5, window_bounds = array<i64: 8, 1>}, {transform_indices = @transform_6, window_bounds = array<i64: 1, 8, 1>}]} {
    %c0_i32 = arith.constant 0 : i32
    %0 = arith.cmpi eq, %arg1, %c0_i32 : i32
    %1 = arith.extui %0 : i1 to i32
    %c0_i32_0 = arith.constant 0 : i32
    %2 = arith.cmpi ne, %1, %c0_i32_0 : i32
    scf.if %2 {
      %cst_12 = arith.constant 0.000000e+00 : f32
      %17 = vector.broadcast %cst_12 : f32 to vector<32x1xf32>
      %c0_13 = arith.constant 0 : index
      %c0_14 = arith.constant 0 : index
      %18 = vector.load %arg9[%c0_13, %c0_14] : memref<32x1xf32, #tpu.memory_space<vmem>>, vector<32x1xf32>
      tpu.vector_store %arg9[%c0_13, %c0_14], %17 {strides = array<i32>} : memref<32x1xf32, #tpu.memory_space<vmem>>, vector<32x1xf32>,
    } else {
    }
    %c0 = arith.constant 0 : index
    %c0_1 = arith.constant 0 : index
    %c0_2 = arith.constant 0 : index
    %3 = vector.load %arg2[%c0, %c0_1, %c0_2] : memref<1x3x128xbf16, #tpu.memory_space<vmem>>, vector<1x3x128xbf16>
    %4 = vector.shape_cast %3 : vector<1x3x128xbf16> to vector<3x128xbf16>
    %c0_3 = arith.constant 0 : index
    %c0_4 = arith.constant 0 : index
    %5 = vector.load %arg3[%c0_3, %c0_4] : memref<32x3xbf16, #tpu.memory_space<vmem>>, vector<32x3xbf16>
    %cst = arith.constant dense<0.000000e+00> : vector<32x128xf32>
    %6 = tpu.matmul %5, %4, %cst {dimension_numbers = #tpu.dot_dimension_numbers<[1], [0], [0], [1], [0, 0, 1, 1], [], []>} : vector<32x3xbf16>, vector<3x128xbf16>, vector<32x128xf32> -> vector<32x128xf32>
    %cst_5 = arith.constant 0.000000e+00 : f32
    %7 = vector.broadcast %cst_5 : f32 to vector<32x128xf32>
    %8 = arith.maximumf %6, %7 : vector<32x128xf32>
    %c0_6 = arith.constant 0 : index
    %c0_7 = arith.constant 0 : index
    %9 = vector.load %arg9[%c0_6, %c0_7] : memref<32x1xf32, #tpu.memory_space<vmem>>, vector<32x1xf32>
    %cst_8 = arith.constant dense<0.000000e+00> : vector<32xf32>
    %10 = vector.multi_reduction <add>, %8, %cst_8 [1] : vector<32x128xf32> to vector<32xf32>
    %11 = vector.shape_cast %10 : vector<32xf32> to vector<32x1xf32>
    %12 = arith.addf %9, %11 : vector<32x1xf32>
    %c0_9 = arith.constant 0 : index
    %c0_10 = arith.constant 0 : index
    %13 = vector.load %arg9[%c0_9, %c0_10] : memref<32x1xf32, #tpu.memory_space<vmem>>, vector<32x1xf32>
    tpu.vector_store %arg9[%c0_9, %c0_10], %12 {strides = array<i32>} : memref<32x1xf32, #tpu.memory_space<vmem>>, vector<32x1xf32>,
    %c3_i32 = arith.constant 3 : i32
    %14 = arith.cmpi eq, %arg1, %c3_i32 : i32
    %15 = arith.extui %14 : i1 to i32
    %c0_i32_11 = arith.constant 0 : i32
    %16 = arith.cmpi ne, %15, %c0_i32_11 : i32
    scf.if %16 {
      %c0_12 = arith.constant 0 : index
      %c0_13 = arith.constant 0 : index
      %17 = vector.load %arg9[%c0_12, %c0_13] : memref<32x1xf32, #tpu.memory_space<vmem>>, vector<32x1xf32>
      %cst_14 = arith.constant 0.001953125 : f32
      %18 = vector.broadcast %cst_14 : f32 to vector<32x1xf32>
      %19 = arith.mulf %17, %18 : vector<32x1xf32>
      %c0_15 = arith.constant 0 : index
      %c0_16 = arith.constant 0 : index
      %20 = vector.load %arg4[%c0_15, %c0_16] : memref<32x32xf32, #tpu.memory_space<vmem>>, vector<32x32xf32>
      %cst_17 = arith.constant dense<0.000000e+00> : vector<32x1xf32>
      %21 = tpu.matmul %20, %19, %cst_17 {dimension_numbers = #tpu.dot_dimension_numbers<[1], [0], [0], [1], [0, 0, 1, 1], [], []>} : vector<32x32xf32>, vector<32x1xf32>, vector<32x1xf32> -> vector<32x1xf32>
      %c0_18 = arith.constant 0 : index
      %c0_19 = arith.constant 0 : index
      %22 = vector.load %arg5[%c0_18, %c0_19] : memref<32x1xf32, #tpu.memory_space<vmem>>, vector<32x1xf32>
      %23 = arith.addf %21, %22 : vector<32x1xf32>
      %cst_20 = arith.constant 0.000000e+00 : f32
      %24 = vector.broadcast %cst_20 : f32 to vector<32x1xf32>
      %25 = arith.maximumf %23, %24 : vector<32x1xf32>
      %c0_21 = arith.constant 0 : index
      %c0_22 = arith.constant 0 : index
      %26 = vector.load %arg6[%c0_21, %c0_22] : memref<8x32xf32, #tpu.memory_space<vmem>>, vector<8x32xf32>
      %cst_23 = arith.constant dense<0.000000e+00> : vector<8x1xf32>
      %27 = tpu.matmul %26, %25, %cst_23 {dimension_numbers = #tpu.dot_dimension_numbers<[1], [0], [0], [1], [0, 0, 1, 1], [], []>} : vector<8x32xf32>, vector<32x1xf32>, vector<8x1xf32> -> vector<8x1xf32>
      %c0_24 = arith.constant 0 : index
      %c0_25 = arith.constant 0 : index
      %28 = vector.load %arg7[%c0_24, %c0_25] : memref<8x1xf32, #tpu.memory_space<vmem>>, vector<8x1xf32>
      %29 = arith.addf %27, %28 : vector<8x1xf32>
      %30 = math.tanh %29 : vector<8x1xf32>
      %cst_26 = arith.constant 3.14159274 : f32
      %31 = vector.broadcast %cst_26 : f32 to vector<8x1xf32>
      %32 = arith.mulf %30, %31 : vector<8x1xf32>
      %c0_27 = arith.constant 0 : index
      %c0_28 = arith.constant 0 : index
      %c0_29 = arith.constant 0 : index
      %33 = vector.load %arg8[%c0_27, %c0_28, %c0_29] : memref<1x8x1xf32, #tpu.memory_space<vmem>>, vector<1x8x1xf32>
      %34 = vector.shape_cast %33 : vector<1x8x1xf32> to vector<8x1xf32>
      %35 = vector.shape_cast %32 : vector<8x1xf32> to vector<1x8x1xf32>
      tpu.vector_store %arg8[%c0_27, %c0_28, %c0_29], %35 {strides = array<i32>} : memref<1x8x1xf32, #tpu.memory_space<vmem>>, vector<1x8x1xf32>,
    } else {
    }
    return
  }
  func.func @transform_0(%arg0: i32, %arg1: i32) -> (i32, i32, i32) {
    %c0_i32 = arith.constant 0 : i32
    %c0_i32_0 = arith.constant 0 : i32
    return %arg0, %c0_i32, %arg1 : i32, i32, i32
  }
  func.func @transform_1(%arg0: i32, %arg1: i32) -> (i32, i32) {
    %c0_i32 = arith.constant 0 : i32
    %c0_i32_0 = arith.constant 0 : i32
    %c0_i32_1 = arith.constant 0 : i32
    return %c0_i32, %c0_i32_0 : i32, i32
  }
  func.func @transform_2(%arg0: i32, %arg1: i32) -> (i32, i32) {
    %c0_i32 = arith.constant 0 : i32
    %c0_i32_0 = arith.constant 0 : i32
    %c0_i32_1 = arith.constant 0 : i32
    return %c0_i32, %c0_i32_0 : i32, i32
  }
  func.func @transform_3(%arg0: i32, %arg1: i32) -> (i32, i32) {
    %c0_i32 = arith.constant 0 : i32
    %c0_i32_0 = arith.constant 0 : i32
    %c0_i32_1 = arith.constant 0 : i32
    return %c0_i32, %c0_i32_0 : i32, i32
  }
  func.func @transform_4(%arg0: i32, %arg1: i32) -> (i32, i32) {
    %c0_i32 = arith.constant 0 : i32
    %c0_i32_0 = arith.constant 0 : i32
    %c0_i32_1 = arith.constant 0 : i32
    return %c0_i32, %c0_i32_0 : i32, i32
  }
  func.func @transform_5(%arg0: i32, %arg1: i32) -> (i32, i32) {
    %c0_i32 = arith.constant 0 : i32
    %c0_i32_0 = arith.constant 0 : i32
    %c0_i32_1 = arith.constant 0 : i32
    return %c0_i32, %c0_i32_0 : i32, i32
  }
  func.func @transform_6(%arg0: i32, %arg1: i32) -> (i32, i32, i32) {
    %c0_i32 = arith.constant 0 : i32
    %c0_i32_0 = arith.constant 0 : i32
    %c0_i32_1 = arith.constant 0 : i32
    return %arg0, %c0_i32, %c0_i32_0 : i32, i32, i32
  }
}

</mosaic_0001>

<llo_original>
// kernel: tpu_custom_call.1
$region0: #{tpu_custom_call.1}
  #allocation0 [shape = 'u32[]', space=smem, size = 0x4, offset = 0x4, fixed_abs, tag = 'smem constant byte address 0x4 - core index']
  #allocation1 [shape = 'u32[144,128]{1,0:T(1,128)}', space=vmem, size = 0x12000, scoped, tag = 'internal scratch']
  #allocation2 [shape = 'f32[32,1]{1,0:T(8,128)}', space=vmem, size = 0x4000, scoped, tag = 'scratch operand']
  %s0 = inlined_call_operand.vmem [shape: bf16[2,3,512], index: 0, kind: input, shape index: {}]
  %s1 = inlined_call_operand.vmem [shape: bf16[32,3], index: 1, kind: input, shape index: {}]
  %s2 = inlined_call_operand.vmem [shape: f32[32,32], index: 2, kind: input, shape index: {}]
  %s3 = inlined_call_operand.vmem [shape: f32[32,1], index: 3, kind: input, shape index: {}]
  %s4 = inlined_call_operand.vmem [shape: f32[8,32], index: 4, kind: input, shape index: {}]
  %s5 = inlined_call_operand.vmem [shape: f32[8,1], index: 5, kind: input, shape index: {}]
  %s6 = inlined_call_operand.vmem [shape: f32[2,8,1], index: 6, kind: output, shape index: {}]
  %s7 = sld [smem:[#allocation0]]
  $region65: #{tpu_custom_call.1} parent=0
    _
  %s9 = ssub.s32 1, %s7
  %s10 = scalar_select 0, %s9, %s7
  loop: start=0, step=1, limit=10
  $region2: #{tpu_custom_call.1} parent=0 // loop_pre_header
    _
  $region3: #{tpu_custom_call.1} parent=0 // loop_header
    %s12 = sphi 0, %s16
    %p13 = scmp.ge.s32.totalorder %s12, 10
    %s19 = sphi 0, %s31
    %s20 = sphi 0, %s27
    %s21 = sphi 0, %s19
    %s22 = sphi 0, %s20
    %s23 = sphi 0, %s21
    %s24 = sphi 0, %s22
    %s36 = sphi 0, %s38
    %s39 = sphi 0, %s36
    %s40 = sphi 0, %s39
    %s56 = sphi 0, %s40
    %s60 = sphi 0, %s60
    %s62 = sphi 0, %s60
    %s63 = sphi 0, %s62
    %s77 = sphi 0, %s63
    %s81 = sphi 0, %s81
    %s83 = sphi 0, %s81
    %s84 = sphi 0, %s83
    %s98 = sphi 0, %s84
    %s102 = sphi 0, %s102
    %s104 = sphi 0, %s102
    %s105 = sphi 0, %s104
    %s119 = sphi 0, %s105
    %s123 = sphi 0, %s123
    %s125 = sphi 0, %s123
    %s126 = sphi 0, %s125
    %s140 = sphi 0, %s126
    %s144 = sphi 0, %s144
    %s146 = sphi 0, %s144
    %s147 = sphi 0, %s146
    %s161 = sphi 0, %s147
    %s167 = sphi 0, %s169
    %s170 = sphi 0, %s167
    %s171 = sphi 0, %s170
    %s187 = sphi 0, %s171
  $region4: #{tpu_custom_call.1} parent=0 // loop_header_branch
    %15 = sbr.rel (%p13) target = $region8
  $region5: #{tpu_custom_call.1} parent=0 // loop_body
    %s17 = ssub.s32 %s12, 1
    %s18 = ssub.s32 %s12, 2
    %s25 = sadd.s32 1, %s20
    %p26 = scmp.ge.s32.totalorder %s25, 4
    %s27 = scalar_select %p26, 0, %s25
    %s28 = sadd.s32 1, %s19
    %s29 = scalar_select %p26, %s28, %s19
    %p30 = scmp.ge.s32.totalorder %s29, 2
    %s31 = scalar_select %p30, 0, %s29
    %s32 = ssub.s32 %s19, %s31
    %s33 = ssub.s32 %s20, %s27
    %s34 = sor.u32 %s32, %s33
    %p35 = scmp.eq.s32.totalorder %s34, 0
    %s37 = sadd.s32 %s36, 1
    %s38 = scalar_select %p35, %s36, %s37
    %p41 = pneg %p35
    %p42 = scmp.eq.s32.totalorder %s12, 7
    %p43 = por %p41, %p42
    %p44 = scmp.ne.s32.totalorder %s36, %s39
    %p45 = scmp.eq.s32.totalorder %s12, 0
    %p46 = por %p44, %p45
    %p47 = scmp.ne.s32.totalorder %s36, %s39
    %p48 = scmp.eq.s32.totalorder %s17, 7
    %p49 = por %p47, %p48
    %p50 = scmp.ne.s32.totalorder %s39, %s40
    %p51 = scmp.eq.s32.totalorder %s17, 0
    %p52 = por %p50, %p51
    %p53 = scmp.ne.s32.totalorder %s39, %s40
    %p54 = scmp.eq.s32.totalorder %s18, 7
    %p55 = por %p53, %p54
    %p57 = scmp.ne.s32.totalorder %s40, %s56
    %p58 = scmp.eq.s32.totalorder %s18, 0
    %p59 = por %p57, %p58
    %s61 = sadd.s32 %s60, 1
    %p64 = scmp.eq.s32.totalorder %s12, 7
    %p65 = scmp.ne.s32.totalorder %s60, %s62
    %p66 = scmp.eq.s32.totalorder %s12, 0
    %p67 = por %p65, %p66
    %p68 = scmp.ne.s32.totalorder %s60, %s62
    %p69 = scmp.eq.s32.totalorder %s17, 7
    %p70 = por %p68, %p69
    %p71 = scmp.ne.s32.totalorder %s62, %s63
    %p72 = scmp.eq.s32.totalorder %s17, 0
    %p73 = por %p71, %p72
    %p74 = scmp.ne.s32.totalorder %s62, %s63
    %p75 = scmp.eq.s32.totalorder %s18, 7
    %p76 = por %p74, %p75
    %p78 = scmp.ne.s32.totalorder %s63, %s77
    %p79 = scmp.eq.s32.totalorder %s18, 0
    %p80 = por %p78, %p79
    %s82 = sadd.s32 %s81, 1
    %p85 = scmp.eq.s32.totalorder %s12, 7
    %p86 = scmp.ne.s32.totalorder %s81, %s83
    %p87 = scmp.eq.s32.totalorder %s12, 0
    %p88 = por %p86, %p87
    %p89 = scmp.ne.s32.totalorder %s81, %s83
    %p90 = scmp.eq.s32.totalorder %s17, 7
    %p91 = por %p89, %p90
    %p92 = scmp.ne.s32.totalorder %s83, %s84
    %p93 = scmp.eq.s32.totalorder %s17, 0
    %p94 = por %p92, %p93
    %p95 = scmp.ne.s32.totalorder %s83, %s84
    %p96 = scmp.eq.s32.totalorder %s18, 7
    %p97 = por %p95, %p96
    %p99 = scmp.ne.s32.totalorder %s84, %s98
    %p100 = scmp.eq.s32.totalorder %s18, 0
    %p101 = por %p99, %p100
    %s103 = sadd.s32 %s102, 1
    %p106 = scmp.eq.s32.totalorder %s12, 7
    %p107 = scmp.ne.s32.totalorder %s102, %s104
    %p108 = scmp.eq.s32.totalorder %s12, 0
    %p109 = por %p107, %p108
    %p110 = scmp.ne.s32.totalorder %s102, %s104
    %p111 = scmp.eq.s32.totalorder %s17, 7
    %p112 = por %p110, %p111
    %p113 = scmp.ne.s32.totalorder %s104, %s105
    %p114 = scmp.eq.s32.totalorder %s17, 0
    %p115 = por %p113, %p114
    %p116 = scmp.ne.s32.totalorder %s104, %s105
    %p117 = scmp.eq.s32.totalorder %s18, 7
    %p118 = por %p116, %p117
    %p120 = scmp.ne.s32.totalorder %s105, %s119
    %p121 = scmp.eq.s32.totalorder %s18, 0
    %p122 = por %p120, %p121
    %s124 = sadd.s32 %s123, 1
    %p127 = scmp.eq.s32.totalorder %s12, 7
    %p128 = scmp.ne.s32.totalorder %s123, %s125
    %p129 = scmp.eq.s32.totalorder %s12, 0
    %p130 = por %p128, %p129
    %p131 = scmp.ne.s32.totalorder %s123, %s125
    %p132 = scmp.eq.s32.totalorder %s17, 7
    %p133 = por %p131, %p132
    %p134 = scmp.ne.s32.totalorder %s125, %s126
    %p135 = scmp.eq.s32.totalorder %s17, 0
    %p136 = por %p134, %p135
    %p137 = scmp.ne.s32.totalorder %s125, %s126
    %p138 = scmp.eq.s32.totalorder %s18, 7
    %p139 = por %p137, %p138
    %p141 = scmp.ne.s32.totalorder %s126, %s140
    %p142 = scmp.eq.s32.totalorder %s18, 0
    %p143 = por %p141, %p142
    %s145 = sadd.s32 %s144, 1
    %p148 = scmp.eq.s32.totalorder %s12, 7
    %p149 = scmp.ne.s32.totalorder %s144, %s146
    %p150 = scmp.eq.s32.totalorder %s12, 0
    %p151 = por %p149, %p150
    %p152 = scmp.ne.s32.totalorder %s144, %s146
    %p153 = scmp.eq.s32.totalorder %s17, 7
    %p154 = por %p152, %p153
    %p155 = scmp.ne.s32.totalorder %s146, %s147
    %p156 = scmp.eq.s32.totalorder %s17, 0
    %p157 = por %p155, %p156
    %p158 = scmp.ne.s32.totalorder %s146, %s147
    %p159 = scmp.eq.s32.totalorder %s18, 7
    %p160 = por %p158, %p159
    %p162 = scmp.ne.s32.totalorder %s147, %s161
    %p163 = scmp.eq.s32.totalorder %s18, 0
    %p164 = por %p162, %p163
    %s165 = ssub.s32 %s19, %s31
    %p166 = scmp.eq.s32.totalorder %s165, 0
    %s168 = sadd.s32 %s167, 1
    %s169 = scalar_select %p166, %s167, %s168
    %p172 = pneg %p166
    %p173 = scmp.eq.s32.totalorder %s12, 7
    %p174 = por %p172, %p173
    %p175 = scmp.ne.s32.totalorder %s167, %s170
    %p176 = scmp.eq.s32.totalorder %s12, 0
    %p177 = por %p175, %p176
    %p178 = scmp.ne.s32.totalorder %s167, %s170
    %p179 = scmp.eq.s32.totalorder %s17, 7
    %p180 = por %p178, %p179
    %p181 = scmp.ne.s32.totalorder %s170, %s171
    %p182 = scmp.eq.s32.totalorder %s17, 0
    %p183 = por %p181, %p182
    %p184 = scmp.ne.s32.totalorder %s170, %s171
    %p185 = scmp.eq.s32.totalorder %s18, 7
    %p186 = por %p184, %p185
    %p188 = scmp.ne.s32.totalorder %s171, %s187
    %p189 = scmp.eq.s32.totalorder %s18, 0
    %p190 = por %p188, %p189
    %p191 = scmp.le.s32.totalorder 1, %s12
    %p192 = scmp.lt.s32.totalorder %s12, 9
    %p193 = pnand %p191, %p192
    %p194 = pneg %p193
    // Predicated region
    $region9: #{tpu_custom_call.1} parent=5 // pred_check
      _
    $region10: #{tpu_custom_call.1} parent=5 // pred_check_branch
      %196 = sbr.rel (%p193) target = $region12
    $region11: #{tpu_custom_call.1} parent=5 // pred_region
      %s197 = ssub.s32 %s12, 1
      // Predicated region
      $region13: #{tpu_custom_call.1} parent=11 // pred_check
        %p198 = pneg %p73
      $region14: #{tpu_custom_call.1} parent=11 // pred_check_branch
        %200 = sbr.rel (%p198) target = $region16
      $region15: #{tpu_custom_call.1} parent=11 // pred_region
        _
      $region16: #{tpu_custom_call.1} parent=11 // pred_fallthru
        _
      // Predicated region
      $region17: #{tpu_custom_call.1} parent=11 // pred_check
        %p201 = pneg %p94
      $region18: #{tpu_custom_call.1} parent=11 // pred_check_branch
        %203 = sbr.rel (%p201) target = $region20
      $region19: #{tpu_custom_call.1} parent=11 // pred_region
        _
      $region20: #{tpu_custom_call.1} parent=11 // pred_fallthru
        _
      // Predicated region
      $region21: #{tpu_custom_call.1} parent=11 // pred_check
        %p204 = pneg %p115
      $region22: #{tpu_custom_call.1} parent=11 // pred_check_branch
        %206 = sbr.rel (%p204) target = $region24
      $region23: #{tpu_custom_call.1} parent=11 // pred_region
        _
      $region24: #{tpu_custom_call.1} parent=11 // pred_fallthru
        _
      // Predicated region
      $region25: #{tpu_custom_call.1} parent=11 // pred_check
        %p207 = pneg %p136
      $region26: #{tpu_custom_call.1} parent=11 // pred_check_branch
        %209 = sbr.rel (%p207) target = $region28
      $region27: #{tpu_custom_call.1} parent=11 // pred_region
        _
      $region28: #{tpu_custom_call.1} parent=11 // pred_fallthru
        _
      // Predicated region
      $region29: #{tpu_custom_call.1} parent=11 // pred_check
        %p210 = pneg %p157
      $region30: #{tpu_custom_call.1} parent=11 // pred_check_branch
        %212 = sbr.rel (%p210) target = $region32
      $region31: #{tpu_custom_call.1} parent=11 // pred_region
        _
      $region32: #{tpu_custom_call.1} parent=11 // pred_fallthru
        _
    $region12: #{tpu_custom_call.1} parent=5 // pred_fallthru
      _
    %p213 = scmp.lt.s32.totalorder %s12, 8
    // Predicated region
    $region33: #{tpu_custom_call.1} parent=5 // pred_check
      %p214 = pneg %p213
    $region34: #{tpu_custom_call.1} parent=5 // pred_check_branch
      %216 = sbr.rel (%p214) target = $region36
    $region35: #{tpu_custom_call.1} parent=5 // pred_region
      // Predicated region
      $region37: #{tpu_custom_call.1} parent=35 // pred_check
        %p217 = pneg %p46
      $region38: #{tpu_custom_call.1} parent=35 // pred_check_branch
        %219 = sbr.rel (%p217) target = $region40
      $region39: #{tpu_custom_call.1} parent=35 // pred_region
        %p220 = scmp.lt.s32.totalorder %s19, 1
        %s221 = scalar_select %p220, %s19, 1
        %p222 = scmp.lt.s32.totalorder %s20, 3
        %s223 = scalar_select %p222, %s20, 3
        %s224 = smul.addr %s221, 4
        %s225 = sadd.s32 %s223, %s224
        %s226 = smul.addr %s225, 2
        %s227 = scalar_lea.vmem %s0, %s226
      $region40: #{tpu_custom_call.1} parent=35 // pred_fallthru
        _
    $region36: #{tpu_custom_call.1} parent=5 // pred_fallthru
      _
    %p228 = scmp.le.s32.totalorder 1, %s12
    %p229 = scmp.lt.s32.totalorder %s12, 9
    %p230 = pnand %p228, %p229
    %p231 = pneg %p230
    // Predicated region
    $region41: #{tpu_custom_call.1} parent=5 // pred_check
      _
    $region42: #{tpu_custom_call.1} parent=5 // pred_check_branch
      %233 = sbr.rel (%p230) target = $region44
    $region43: #{tpu_custom_call.1} parent=5 // pred_region
      %s234 = ssub.s32 %s12, 1
      %p235 = scmp.lt.s32.totalorder %s21, 1
      %s236 = scalar_select %p235, %s21, 1
      %p237 = scmp.lt.s32.totalorder %s22, 3
      %s238 = scalar_select %p237, %s22, 3
      %s239 = smul.addr %s236, 4
      %s240 = sadd.s32 %s238, %s239
      %s241 = smul.addr %s240, 2
      %s242 = scalar_lea.vmem %s0, %s241
      %p243 = pneg %p52
      %p244 = pneg %p49
      %p245 = pneg %p73
      %p246 = pneg %p70
      %p247 = pneg %p94
      %p248 = pneg %p91
      %p249 = pneg %p115
      %p250 = pneg %p112
      %p251 = pneg %p136
      %p252 = pneg %p133
      %p253 = pneg %p157
      %p254 = pneg %p154
      %p255 = pneg %p183
      %p256 = pneg %p180
      %p257 = scmp.lt.s32.totalorder %s21, 1
      %s258 = scalar_select %p257, %s21, 1
      %s259 = smul.addr %s258, 8
      %s260 = scalar_lea.vmem %s6, %s259
      %p261 = scmp.lt.s32.totalorder %s21, 1
      %s262 = scalar_select %p261, %s21, 1
      %p263 = scmp.lt.s32.totalorder %s22, 3
      %s264 = scalar_select %p263, %s22, 3
      %s265 = smul.addr %s262, 4
      %s266 = sadd.s32 %s264, %s265
      %s267 = smul.addr %s266, 2
      %s268 = scalar_lea.vmem %s0, %s267
      %p269 = scmp.lt.s32.totalorder %s21, 1
      %s270 = scalar_select %p269, %s21, 1
      %s271 = smul.addr %s270, 8
      %s272 = scalar_lea.vmem %s6, %s271
      %p274 = scmp.eq.s32.totalorder %s22, 0
      // Predicated region
      $region45: #{tpu_custom_call.1} parent=43 // pred_check
        %p275 = pneg %p274
      $region46: #{tpu_custom_call.1} parent=43 // pred_check_branch
        %277 = sbr.rel (%p275) target = $region48
      $region47: #{tpu_custom_call.1} parent=43 // pred_region
        %vm278 = vcmask 7168
        %279 = vst.msk [vmem:[#allocation2] sm:$0xff] %vm278, 0.0
        %280 = vst.msk [vmem:[#allocation2 + $0x8] sm:$0xff] %vm278, 0.0
        %281 = vst.msk [vmem:[#allocation2 + $0x10] sm:$0xff] %vm278, 0.0
        %282 = vst.msk [vmem:[#allocation2 + $0x18] sm:$0xff] %vm278, 0.0
      $region48: #{tpu_custom_call.1} parent=43 // pred_fallthru
        _
      %v283 = vld [vmem:[%s268] sm:$0x3]
      %v284 = vld [vmem:[%s1] sm:$0xf]
      %v285 = vld [vmem:[%s1 + $0x4] sm:$0xf]
      %v286 = vld [vmem:[%s1 + $0x8] sm:$0xf]
      %v287 = vld [vmem:[%s1 + $0xc] sm:$0xf]
      %v292 = vunpack.c.l.b16 %v284
      %v293 = vunpack.c.l.b16 %v285
      %v294 = vunpack.c.l.b16 %v286
      %v295 = vunpack.c.l.b16 %v287
      %v296 = vpack.c.b16 %v293, %v292
      %v297 = vpack.c.b16 %v295, %v294
      %vm298 = vcmask 23552
      %v300 = vsel %vm298, %v296, 0
      %v303 = vsel %vm298, %v297, 0
      %vm305 = vcmask 1040384
      %vm306 = vcmask 1041408
      %v307 = vsel %vm305, 4294967295, 65535
      %v308 = vsel %vm306, %v307, 0
      %v310 = vand.u32 %v283, %v308
      %312 = vmatprep.subr.bf16.mxu0 0
      %313 = vmatpush1.bf16.msra.mxu0 %v310
      %314 = vmatprep.subr.bf16.mxu0 0
      %315 = vmatpush1.bf16.msra.mxu0 0
      %316 = vmatprep.subr.bf16.mxu0 0
      %317 = vmatpush1.bf16.msra.mxu0 0
      %318 = vmatprep.subr.bf16.mxu0 0
      %319 = vmatpush1.bf16.msra.mxu0 0
      %320 = vmatprep.subr.bf16.mxu0 0
      %321 = vmatpush1.bf16.msra.mxu0 0
      %322 = vmatprep.subr.bf16.mxu0 0
      %323 = vmatpush1.bf16.msra.mxu0 0
      %324 = vmatprep.subr.bf16.mxu0 0
      %325 = vmatpush1.bf16.msra.mxu0 0
      %326 = vmatprep.subr.bf16.mxu0 0
      %327 = vmatpush1.bf16.msra.mxu0 0
      %328 = vmatprep.subr.bf16.mxu0 0
      %329 = vmatpush1.bf16.msra.mxu0 0
      %330 = vmatprep.subr.bf16.mxu0 0
      %331 = vmatpush1.bf16.msra.mxu0 0
      %332 = vmatprep.subr.bf16.mxu0 0
      %333 = vmatpush1.bf16.msra.mxu0 0
      %334 = vmatprep.subr.bf16.mxu0 0
      %335 = vmatpush1.bf16.msra.mxu0 0
      %336 = vmatprep.subr.bf16.mxu0 0
      %337 = vmatpush1.bf16.msra.mxu0 0
      %338 = vmatprep.subr.bf16.mxu0 0
      %339 = vmatpush1.bf16.msra.mxu0 0
      %340 = vmatprep.subr.bf16.mxu0 0
      %341 = vmatpush1.bf16.msra.mxu0 0
      %342 = vmatprep.subr.bf16.mxu0 0
      %343 = vmatpush1.bf16.msra.mxu0 0
      %344 = vmatprep.mubr.bf16.mxu0 0
      %345 = vmatmul.mubr.bf16.gmra.mrb[0].mxu0 %v300
      %v346 = vpop.f32.mrb[0].mxu0
      %v347 = vadd.f32 0.0, %v346
      %v348 = vpop.f32.mrb[0].mxu0
      %v349 = vpop.f32.mrb[0].mxu0
      %v350 = vadd.f32 0.0, %v349
      %v351 = vpop.f32.mrb[0].mxu0
      %352 = vmatprep.mubr.bf16.mxu0 0
      %353 = vmatmul.mubr.bf16.gmra.mrb[0].mxu0 %v303
      %v354 = vpop.f32.mrb[0].mxu0
      %v355 = vadd.f32 0.0, %v354
      %v356 = vpop.f32.mrb[0].mxu0
      %v357 = vpop.f32.mrb[0].mxu0
      %v358 = vadd.f32 0.0, %v357
      %v359 = vpop.f32.mrb[0].mxu0
      %360 = vdwg.mxu0
      %v361 = vmax.f32 %v347, 0.0
      %v362 = vmax.f32 %v350, 0.0
      %v363 = vmax.f32 %v355, 0.0
      %v364 = vmax.f32 %v358, 0.0
      %v365 = vld [vmem:[#allocation2] sm:$0xff]
      %v366 = vld [vmem:[#allocation2 + $0x8] sm:$0xff]
      %v367 = vld [vmem:[#allocation2 + $0x10] sm:$0xff]
      %v368 = vld [vmem:[#allocation2 + $0x18] sm:$0xff]
      %369 = vadd.xlane.f32.xlu0 %v361
      %v370 = vpop.xlane.xlu0 %369
      %371 = vadd.xlane.f32.xlu0 %v362
      %v372 = vpop.xlane.xlu0 %371
      %373 = vadd.xlane.f32.xlu0 %v363
      %v374 = vpop.xlane.xlu0 %373
      %375 = vadd.xlane.f32.xlu0 %v364
      %v376 = vpop.xlane.xlu0 %375
      %v377 = vadd.f32 %v365, %v370
      %v378 = vadd.f32 %v366, %v372
      %v379 = vadd.f32 %v367, %v374
      %v380 = vadd.f32 %v368, %v376
      %vm381 = vcmask 7168
      %382 = vst.msk [vmem:[#allocation2] sm:$0xff] %vm381, %v377
      %383 = vst.msk [vmem:[#allocation2 + $0x8] sm:$0xff] %vm381, %v378
      %384 = vst.msk [vmem:[#allocation2 + $0x10] sm:$0xff] %vm381, %v379
      %385 = vst.msk [vmem:[#allocation2 + $0x18] sm:$0xff] %vm381, %v380
      %p386 = scmp.eq.s32.totalorder %s22, 3
      // Predicated region
      $region49: #{tpu_custom_call.1} parent=43 // pred_check
        %p387 = pneg %p386
      $region50: #{tpu_custom_call.1} parent=43 // pred_check_branch
        %389 = sbr.rel (%p387) target = $region52
      $region51: #{tpu_custom_call.1} parent=43 // pred_region
        %v390 = vld [vmem:[#allocation2] sm:$0xff]
        %v391 = vld [vmem:[#allocation2 + $0x8] sm:$0xff]
        %v392 = vld [vmem:[#allocation2 + $0x10] sm:$0xff]
        %v393 = vld [vmem:[#allocation2 + $0x18] sm:$0xff]
        %v394 = vmul.f32 %v390, 0.001953125
        %v395 = vmul.f32 %v391, 0.001953125
        %v396 = vmul.f32 %v392, 0.001953125
        %v397 = vmul.f32 %v393, 0.001953125
        %v398 = vld [vmem:[%s2] sm:$0xff]
        %v399 = vld [vmem:[%s2 + $0x8] sm:$0xff]
        %v400 = vld [vmem:[%s2 + $0x10] sm:$0xff]
        %v401 = vld [vmem:[%s2 + $0x18] sm:$0xff]
        %v402 = vld [vmem:[%s3] sm:$0xff]
        %v403 = vld [vmem:[%s3 + $0x8] sm:$0xff]
        %v404 = vld [vmem:[%s3 + $0x10] sm:$0xff]
        %v405 = vld [vmem:[%s3 + $0x18] sm:$0xff]
        %vm406 = vcmask 261120
        %v408 = vsel %vm406, %v398, 0
        %v411 = vsel %vm406, %v399, 0
        %v414 = vsel %vm406, %v400, 0
        %v417 = vsel %vm406, %v401, 0
        %419 = vmatprep.subr.mxu0 0.0
        %420 = vmatpush1.msra.mxu0 %v394
        %421 = vmatprep.subr.mxu0 0.0
        %422 = vmatpush1.msra.mxu0 %v395
        %423 = vmatprep.subr.mxu0 0.0
        %424 = vmatpush1.msra.mxu0 %v396
        %425 = vmatprep.subr.mxu0 0.0
        %426 = vmatpush1.msra.mxu0 %v397
        %427 = vmatprep.subr.mxu0 0.0
        %428 = vmatpush1.msra.mxu0 0.0
        %429 = vmatprep.subr.mxu0 0.0
        %430 = vmatpush1.msra.mxu0 0.0
        %431 = vmatprep.subr.mxu0 0.0
        %432 = vmatpush1.msra.mxu0 0.0
        %433 = vmatprep.subr.mxu0 0.0
        %434 = vmatpush1.msra.mxu0 0.0
        %435 = vmatprep.subr.mxu0 0.0
        %436 = vmatpush1.msra.mxu0 0.0
        %437 = vmatprep.subr.mxu0 0.0
        %438 = vmatpush1.msra.mxu0 0.0
        %439 = vmatprep.subr.mxu0 0.0
        %440 = vmatpush1.msra.mxu0 0.0
        %441 = vmatprep.subr.mxu0 0.0
        %442 = vmatpush1.msra.mxu0 0.0
        %443 = vmatprep.subr.mxu0 0.0
        %444 = vmatpush1.msra.mxu0 0.0
        %445 = vmatprep.subr.mxu0 0.0
        %446 = vmatpush1.msra.mxu0 0.0
        %447 = vmatprep.subr.mxu0 0.0
        %448 = vmatpush1.msra.mxu0 0.0
        %449 = vmatprep.subr.mxu0 0.0
        %450 = vmatpush1.msra.mxu0 0.0
        %451 = vmatprep.subr.mxu0 0.0
        %452 = vmatpush1.msra.mxu0 0.0
        %453 = vmatprep.subr.mxu0 0.0
        %454 = vmatpush1.msra.mxu0 0.0
        %455 = vmatprep.subr.mxu0 0.0
        %456 = vmatpush1.msra.mxu0 0.0
        %457 = vmatprep.subr.mxu0 0.0
        %458 = vmatpush1.msra.mxu0 0.0
        %459 = vmatprep.subr.mxu0 0.0
        %460 = vmatpush1.msra.mxu0 0.0
        %461 = vmatprep.subr.mxu0 0.0
        %462 = vmatpush1.msra.mxu0 0.0
        %463 = vmatprep.subr.mxu0 0.0
        %464 = vmatpush1.msra.mxu0 0.0
        %465 = vmatprep.subr.mxu0 0.0
        %466 = vmatpush1.msra.mxu0 0.0
        %467 = vmatprep.subr.mxu0 0.0
        %468 = vmatpush1.msra.mxu0 0.0
        %469 = vmatprep.subr.mxu0 0.0
        %470 = vmatpush1.msra.mxu0 0.0
        %471 = vmatprep.subr.mxu0 0.0
        %472 = vmatpush1.msra.mxu0 0.0
        %473 = vmatprep.subr.mxu0 0.0
        %474 = vmatpush1.msra.mxu0 0.0
        %475 = vmatprep.subr.mxu0 0.0
        %476 = vmatpush1.msra.mxu0 0.0
        %477 = vmatprep.subr.mxu0 0.0
        %478 = vmatpush1.msra.mxu0 0.0
        %479 = vmatprep.subr.mxu0 0.0
        %480 = vmatpush1.msra.mxu0 0.0
        %481 = vmatprep.subr.mxu0 0.0
        %482 = vmatpush1.msra.mxu0 0.0
        %483 = vmatprep.mubr.f32.mxu0 0.0
        %484 = vmatmul.mubr.f32.gmra.mrb[0].mxu0 %v408
        %v485 = vpop.f32.mrb[0].mxu0
        %v486 = vadd.f32 %v402, %v485
        %v487 = vpop.f32.mrb[0].mxu0
        %488 = vmatprep.mubr.f32.mxu0 0.0
        %489 = vmatmul.mubr.f32.gmra.mrb[0].mxu0 %v411
        %v490 = vpop.f32.mrb[0].mxu0
        %v491 = vadd.f32 %v403, %v490
        %v492 = vpop.f32.mrb[0].mxu0
        %493 = vmatprep.mubr.f32.mxu0 0.0
        %494 = vmatmul.mubr.f32.gmra.mrb[0].mxu0 %v414
        %v495 = vpop.f32.mrb[0].mxu0
        %v496 = vadd.f32 %v404, %v495
        %v497 = vpop.f32.mrb[0].mxu0
        %498 = vmatprep.mubr.f32.mxu0 0.0
        %499 = vmatmul.mubr.f32.gmra.mrb[0].mxu0 %v417
        %v500 = vpop.f32.mrb[0].mxu0
        %v501 = vadd.f32 %v405, %v500
        %v502 = vpop.f32.mrb[0].mxu0
        %503 = vdwg.mxu0
        %v504 = vmax.f32 %v486, 0.0
        %v505 = vmax.f32 %v491, 0.0
        %v506 = vmax.f32 %v496, 0.0
        %v507 = vmax.f32 %v501, 0.0
        %v508 = vld [vmem:[%s4] sm:$0xff]
        %v509 = vld [vmem:[%s5] sm:$0xff]
        %v511 = vsel %vm406, %v508, 0
        %513 = vmatprep.subr.mxu0 0.0
        %514 = vmatpush1.msra.mxu0 %v504
        %515 = vmatprep.subr.mxu0 0.0
        %516 = vmatpush1.msra.mxu0 %v505
        %517 = vmatprep.subr.mxu0 0.0
        %518 = vmatpush1.msra.mxu0 %v506
        %519 = vmatprep.subr.mxu0 0.0
        %520 = vmatpush1.msra.mxu0 %v507
        %521 = vmatprep.subr.mxu0 0.0
        %522 = vmatpush1.msra.mxu0 0.0
        %523 = vmatprep.subr.mxu0 0.0
        %524 = vmatpush1.msra.mxu0 0.0
        %525 = vmatprep.subr.mxu0 0.0
        %526 = vmatpush1.msra.mxu0 0.0
        %527 = vmatprep.subr.mxu0 0.0
        %528 = vmatpush1.msra.mxu0 0.0
        %529 = vmatprep.subr.mxu0 0.0
        %530 = vmatpush1.msra.mxu0 0.0
        %531 = vmatprep.subr.mxu0 0.0
        %532 = vmatpush1.msra.mxu0 0.0
        %533 = vmatprep.subr.mxu0 0.0
        %534 = vmatpush1.msra.mxu0 0.0
        %535 = vmatprep.subr.mxu0 0.0
        %536 = vmatpush1.msra.mxu0 0.0
        %537 = vmatprep.subr.mxu0 0.0
        %538 = vmatpush1.msra.mxu0 0.0
        %539 = vmatprep.subr.mxu0 0.0
        %540 = vmatpush1.msra.mxu0 0.0
        %541 = vmatprep.subr.mxu0 0.0
        %542 = vmatpush1.msra.mxu0 0.0
        %543 = vmatprep.subr.mxu0 0.0
        %544 = vmatpush1.msra.mxu0 0.0
        %545 = vmatprep.subr.mxu0 0.0
        %546 = vmatpush1.msra.mxu0 0.0
        %547 = vmatprep.subr.mxu0 0.0
        %548 = vmatpush1.msra.mxu0 0.0
        %549 = vmatprep.subr.mxu0 0.0
        %550 = vmatpush1.msra.mxu0 0.0
        %551 = vmatprep.subr.mxu0 0.0
        %552 = vmatpush1.msra.mxu0 0.0
        %553 = vmatprep.subr.mxu0 0.0
        %554 = vmatpush1.msra.mxu0 0.0
        %555 = vmatprep.subr.mxu0 0.0
        %556 = vmatpush1.msra.mxu0 0.0
        %557 = vmatprep.subr.mxu0 0.0
        %558 = vmatpush1.msra.mxu0 0.0
        %559 = vmatprep.subr.mxu0 0.0
        %560 = vmatpush1.msra.mxu0 0.0
        %561 = vmatprep.subr.mxu0 0.0
        %562 = vmatpush1.msra.mxu0 0.0
        %563 = vmatprep.subr.mxu0 0.0
        %564 = vmatpush1.msra.mxu0 0.0
        %565 = vmatprep.subr.mxu0 0.0
        %566 = vmatpush1.msra.mxu0 0.0
        %567 = vmatprep.subr.mxu0 0.0
        %568 = vmatpush1.msra.mxu0 0.0
        %569 = vmatprep.subr.mxu0 0.0
        %570 = vmatpush1.msra.mxu0 0.0
        %571 = vmatprep.subr.mxu0 0.0
        %572 = vmatpush1.msra.mxu0 0.0
        %573 = vmatprep.subr.mxu0 0.0
        %574 = vmatpush1.msra.mxu0 0.0
        %575 = vmatprep.subr.mxu0 0.0
        %576 = vmatpush1.msra.mxu0 0.0
        %577 = vmatprep.mubr.f32.mxu0 0.0
        %578 = vmatmul.mubr.f32.gmra.mrb[0].mxu0 %v511
        %v579 = vpop.f32.mrb[0].mxu0
        %v580 = vadd.f32 %v509, %v579
        %v581 = vpop.f32.mrb[0].mxu0
        %582 = vdwg.mxu0
        %v583 = vtanh.pop %v580
        %v584 = vmul.f32 %v583, 3.1415927
        %585 = vst.msk [vmem:[%s272] sm:$0xff] %vm381, %v584
      $region52: #{tpu_custom_call.1} parent=43 // pred_fallthru
        _
      %p586 = scmp.lt.s32.totalorder %s21, 1
      %s587 = scalar_select %p586, %s21, 1
      %s588 = smul.addr %s587, 8
      %s589 = scalar_lea.vmem %s6, %s588
      // Predicated region
      $region53: #{tpu_custom_call.1} parent=43 // pred_check
        %p590 = pneg %p180
      $region54: #{tpu_custom_call.1} parent=43 // pred_check_branch
        %592 = sbr.rel (%p590) target = $region56
      $region55: #{tpu_custom_call.1} parent=43 // pred_region
        _
      $region56: #{tpu_custom_call.1} parent=43 // pred_fallthru
        _
    $region44: #{tpu_custom_call.1} parent=5 // pred_fallthru
      _
    %p593 = scmp.le.s32.totalorder 2, %s12
    // Predicated region
    $region57: #{tpu_custom_call.1} parent=5 // pred_check
      %p594 = pneg %p593
    $region58: #{tpu_custom_call.1} parent=5 // pred_check_branch
      %596 = sbr.rel (%p594) target = $region60
    $region59: #{tpu_custom_call.1} parent=5 // pred_region
      %s597 = ssub.s32 %s12, 2
      // Predicated region
      $region61: #{tpu_custom_call.1} parent=59 // pred_check
        %p598 = pneg %p186
      $region62: #{tpu_custom_call.1} parent=59 // pred_check_branch
        %600 = sbr.rel (%p598) target = $region64
      $region63: #{tpu_custom_call.1} parent=59 // pred_region
        %p601 = scmp.lt.s32.totalorder %s23, 1
        %s602 = scalar_select %p601, %s23, 1
        %s603 = smul.addr %s602, 8
        %s604 = scalar_lea.vmem %s6, %s603
      $region64: #{tpu_custom_call.1} parent=59 // pred_fallthru
        _
    $region60: #{tpu_custom_call.1} parent=5 // pred_fallthru
      _
  $region6: #{tpu_custom_call.1} parent=0 // loop_footer
    %s16 = sadd.s32 1, %s12
  $region7: #{tpu_custom_call.1} parent=0 // loop_footer_branch
    %11 = sbr.rel target = $region3
  $region8: #{tpu_custom_call.1} parent=0 // loop_exit
    _

</llo_original>
